<compile_context>
chip_gen: v5e
topology: v5e:2x2
jax: 0.10.0
libtpu: 0.0.40
codegen_flags: <defaults>
</compile_context>

<pallas_src>
import jax
import jax.numpy as jnp
import numpy as np
from jax.experimental import pallas as pl
from jax.experimental.pallas import tpu as pltpu

# ---- config (mirrors config/vocab of the PyTorch module) ----
VOCAB_SIZE = 50
EMBED_DIM = 32     # config.embed_dim
HIDDEN_DIM = 32    # config.hidden_dim
NUM_CLASSES = 4    # vocab.get_num_classes() / config.polarities_dim
BATCH = 2
SEQ = 8
# num_layers = 1, bidirectional = False

B_PAD = 8          # full sublane set
C_PAD = 128        # lane-dense classifier output block

# row offsets of each section inside the packed parameter slab (all 128 lanes
# wide, every section starts on an 8-row tile boundary)
_R_WIH = 0                       # (EMBED_DIM, 4H)
_R_WHH = _R_WIH + EMBED_DIM      # (HIDDEN_DIM, 4H)
_R_B = _R_WHH + HIDDEN_DIM       # (8, 4H)   row 0 = bias_ih + bias_hh
_R_WOUT = _R_B + 8               # (HIDDEN_DIM, C_PAD)
_R_BOUT = _R_WOUT + HIDDEN_DIM   # (8, C_PAD) row 0 = classifier bias
_R_TOTAL = _R_BOUT + 8           # 112 rows


def lstm_kernel(x_ref, lens_ref, p_ref, o_ref):
    """Full LSTM recurrence + final dense projection, resident in VMEM.

    x_ref:    (S*B_PAD, E)     f32  time-major flattened embeddings (row = t*B_PAD + b)
    lens_ref: (B_PAD, 1)       i32  number of valid (non-pad) timesteps per sequence
    p_ref:    (112, 128)       f32  packed [w_ih; w_hh; bias; w_out; b_out] slab
    o_ref:    (B_PAD, C_PAD)   f32  logits (lane-dense, sliced outside)
    """
    SB, _ = x_ref.shape
    B = lens_ref.shape[0]
    S = SB // B
    H = HIDDEN_DIM

    # one-time loads / static sublane slices of the packed slab
    w_ih = p_ref[_R_WIH:_R_WIH + EMBED_DIM, :].astype(jnp.bfloat16)   # (E, 4H)
    w_hh = p_ref[_R_WHH:_R_WHH + H, :].astype(jnp.bfloat16)           # (H, 4H)
    bias = p_ref[_R_B:_R_B + 8, :][0:1, :]                            # (1, 4H) f32
    w_out = p_ref[_R_WOUT:_R_WOUT + H, :].astype(jnp.bfloat16)        # (H, C_PAD)
    b_out = p_ref[_R_BOUT:_R_BOUT + 8, :][0:1, :]                     # (1, C_PAD) f32
    lens = lens_ref[...]                                              # (B, 1)  i32

    # input projection hoisted off the serial chain: one MXU matmul for all steps
    xw = jnp.dot(x_ref[...].astype(jnp.bfloat16), w_ih,
                 preferred_element_type=jnp.float32) + bias           # (S*B, 4H) f32

    # h carried in bf16 (only ever consumed by bf16 MXU matmuls); c stays f32
    h = jnp.zeros((B, H), jnp.bfloat16)
    c = jnp.zeros((B, H), jnp.float32)

    # fully unrolled recurrence (S is a small static trip count)
    for t in range(S):
        gates = xw[t * B:(t + 1) * B, :] + jnp.dot(
            h, w_hh, preferred_element_type=jnp.float32)              # (B, 4H) f32
        # one full-vreg sigmoid push covers i/f/o; tanh push narrowed to g lanes
        sig = jax.nn.sigmoid(gates)
        i_g = sig[:, 0 * H:1 * H]
        f_g = sig[:, 1 * H:2 * H]
        o_g = sig[:, 3 * H:4 * H]
        g_g = jnp.tanh(gates[:, 2 * H:3 * H])
        c_new = f_g * c + i_g * g_g
        h_new = o_g * jnp.tanh(c_new)
        # packed-sequence semantics: only update state while t < x_len[b]
        mask = lens > t                                               # (B, 1) bool
        h = jnp.where(mask, h_new.astype(jnp.bfloat16), h)
        c = jnp.where(mask, c_new, c)

    # dense classifier on the final hidden state (bf16 MXU, f32 acc, lane-dense store)
    o_ref[...] = (jnp.dot(h, w_out, preferred_element_type=jnp.float32) + b_out)


def pack_params(params):
    """Concatenate the five 128-lane-wide parameter tensors into one slab."""
    b_blk = jnp.pad(params["b"], ((0, 7), (0, 0)))                            # (8, 128)
    w_out_blk = jnp.pad(params["w_out"], ((0, 0), (0, C_PAD - NUM_CLASSES)))  # (H, 128)
    b_out_blk = jnp.pad(params["b_out"], ((0, 7), (0, C_PAD - NUM_CLASSES)))  # (8, 128)
    slab = jnp.concatenate(
        [params["w_ih"], params["w_hh"], b_blk, w_out_blk, b_out_blk], axis=0)
    assert slab.shape == (_R_TOTAL, C_PAD)
    return slab.astype(jnp.float32)


def lstm_forward(input_ids, params):
    """input_ids: (B, S) int32 token ids (0 == padding). Returns logits (B, C)."""
    B, S = input_ids.shape
    # glue: embedding gather + dropout (identity in eval)
    x = jnp.take(params["embedding"], input_ids, axis=0).astype(jnp.float32)  # (B,S,E)
    lens = jnp.sum(input_ids != 0, axis=-1).astype(jnp.int32)                 # (B,)

    # pad batch to a full sublane set; padded rows have length 0 (never update)
    pad_b = B_PAD - B
    x_p = jnp.pad(x, ((0, pad_b), (0, 0), (0, 0)))
    lens_p = jnp.pad(lens, (0, pad_b))[:, None]                               # (B_PAD,1)

    # time-major flatten: row index = t * B_PAD + b
    x_tm = jnp.transpose(x_p, (1, 0, 2)).reshape(S * B_PAD, EMBED_DIM)

    vspec = pl.BlockSpec(memory_space=pltpu.MemorySpace.VMEM)
    out = pl.pallas_call(
        lstm_kernel,
        out_shape=jax.ShapeDtypeStruct((B_PAD, C_PAD), jnp.float32),
        in_specs=[vspec, vspec, vspec],
        out_specs=vspec,
    )(x_tm, lens_p, pack_params(params))

    logits = out[:B, :NUM_CLASSES]
    # module semantics: if every sequence is all-padding, return exact zeros
    all_empty = jnp.all(lens == 0)
    return jnp.where(all_empty, jnp.zeros_like(logits), logits)


def lstm_reference(input_ids, params):
    """Pure-JAX f32 reference with identical semantics (for correctness check)."""
    x = jnp.take(params["embedding"], input_ids, axis=0).astype(jnp.float32)
    lens = jnp.sum(input_ids != 0, axis=-1).astype(jnp.int32)[:, None]
    B, S, _ = x.shape
    H = HIDDEN_DIM
    h = jnp.zeros((B, H), jnp.float32)
    c = jnp.zeros((B, H), jnp.float32)
    for t in range(S):
        gates = x[:, t, :] @ params["w_ih"] + h @ params["w_hh"] + params["b"]
        i_g = jax.nn.sigmoid(gates[:, 0 * H:1 * H])
        f_g = jax.nn.sigmoid(gates[:, 1 * H:2 * H])
        g_g = jnp.tanh(gates[:, 2 * H:3 * H])
        o_g = jax.nn.sigmoid(gates[:, 3 * H:4 * H])
        c_new = f_g * c + i_g * g_g
        h_new = o_g * jnp.tanh(c_new)
        mask = lens > t
        h = jnp.where(mask, h_new, h)
        c = jnp.where(mask, c_new, c)
    logits = h @ params["w_out"] + params["b_out"]
    all_empty = jnp.all(lens == 0)
    return jnp.where(all_empty, jnp.zeros_like(logits), logits)


def init_params(key):
    k_emb, k_wi, k_wh, k_bi, k_bh, k_wo, k_bo = jax.random.split(key, 7)
    H, E, C = HIDDEN_DIM, EMBED_DIM, NUM_CLASSES
    s = 1.0 / np.sqrt(H)
    emb = jax.random.uniform(k_emb, (VOCAB_SIZE, E), jnp.float32, -0.1, 0.1)
    w_ih = jax.random.uniform(k_wi, (E, 4 * H), jnp.float32, -s, s)
    w_hh = jax.random.uniform(k_wh, (H, 4 * H), jnp.float32, -s, s)
    b = (jax.random.uniform(k_bi, (1, 4 * H), jnp.float32, -s, s)
         + jax.random.uniform(k_bh, (1, 4 * H), jnp.float32, -s, s))
    so = 1.0 / np.sqrt(H)
    w_out = jax.random.uniform(k_wo, (H, C), jnp.float32, -so, so)
    b_out = jax.random.uniform(k_bo, (1, C), jnp.float32, -so, so)
    return dict(embedding=emb, w_ih=w_ih, w_hh=w_hh, b=b, w_out=w_out, b_out=b_out)


if __name__ == "__main__":
    key = jax.random.PRNGKey(0)
    k_params, k_ids = jax.random.split(key)
    params = init_params(k_params)

    # deterministic token ids in [1, VOCAB); zero out the tail of row 1 as padding
    input_ids = jax.random.randint(k_ids, (BATCH, SEQ), 1, VOCAB_SIZE, dtype=jnp.int32)
    pad_mask = jnp.arange(SEQ)[None, :] < jnp.array([[SEQ], [5]])  # lengths 8 and 5
    input_ids = jnp.where(pad_mask, input_ids, 0)

    logits = jax.block_until_ready(lstm_forward(input_ids, params))
    ref = jax.block_until_ready(lstm_reference(input_ids, params))

    assert logits.shape == (BATCH, NUM_CLASSES)
    # tolerance accounts for bf16 MXU operands + bf16-carried h (f32 accumulation)
    np.testing.assert_allclose(np.asarray(logits), np.asarray(ref),
                               rtol=5e-2, atol=5e-2)

    # all-padding batch must return exact zeros (module shortcut)
    empty_ids = jnp.zeros((BATCH, SEQ), jnp.int32)
    empty_logits = jax.block_until_ready(lstm_forward(empty_ids, params))
    np.testing.assert_array_equal(np.asarray(empty_logits),
                                  np.zeros((BATCH, NUM_CLASSES), np.float32))

    print("KERNEL_OK")
</pallas_src>

<mosaic_0001>
module attributes {stable_mosaic.version = 11 : i64} {
  func.func @lstm_kernel(%arg0: memref<64x32xf32, #tpu.memory_space<vmem>>, %arg1: memref<8x1xi32, #tpu.memory_space<vmem>>, %arg2: memref<112x128xf32, #tpu.memory_space<vmem>>, %arg3: memref<8x128xf32, #tpu.memory_space<vmem>>) attributes {dimension_semantics = [], scalar_prefetch = 0 : i64, scratch_operands = 0 : i64, tpu.core_type = #tpu.core_type<tc>} {
    %c0 = arith.constant 0 : index
    %c0_0 = arith.constant 0 : index
    %0 = vector.load %arg2[%c0, %c0_0] : memref<112x128xf32, #tpu.memory_space<vmem>>, vector<32x128xf32>
    %1 = arith.truncf %0 : vector<32x128xf32> to vector<32x128xbf16>
    %c32 = arith.constant 32 : index
    %c0_1 = arith.constant 0 : index
    %2 = vector.load %arg2[%c32, %c0_1] : memref<112x128xf32, #tpu.memory_space<vmem>>, vector<32x128xf32>
    %3 = arith.truncf %2 : vector<32x128xf32> to vector<32x128xbf16>
    %c64 = arith.constant 64 : index
    %c0_2 = arith.constant 0 : index
    %4 = vector.load %arg2[%c64, %c0_2] : memref<112x128xf32, #tpu.memory_space<vmem>>, vector<8x128xf32>
    %5 = vector.extract_strided_slice %4 {offsets = [0, 0], sizes = [1, 128], strides = [1, 1]} : vector<8x128xf32> to vector<1x128xf32>
    %c72 = arith.constant 72 : index
    %c0_3 = arith.constant 0 : index
    %6 = vector.load %arg2[%c72, %c0_3] : memref<112x128xf32, #tpu.memory_space<vmem>>, vector<32x128xf32>
    %7 = arith.truncf %6 : vector<32x128xf32> to vector<32x128xbf16>
    %c104 = arith.constant 104 : index
    %c0_4 = arith.constant 0 : index
    %8 = vector.load %arg2[%c104, %c0_4] : memref<112x128xf32, #tpu.memory_space<vmem>>, vector<8x128xf32>
    %9 = vector.extract_strided_slice %8 {offsets = [0, 0], sizes = [1, 128], strides = [1, 1]} : vector<8x128xf32> to vector<1x128xf32>
    %c0_5 = arith.constant 0 : index
    %c0_6 = arith.constant 0 : index
    %10 = vector.load %arg1[%c0_5, %c0_6] : memref<8x1xi32, #tpu.memory_space<vmem>>, vector<8x1xi32>
    %c0_7 = arith.constant 0 : index
    %c0_8 = arith.constant 0 : index
    %11 = vector.load %arg0[%c0_7, %c0_8] : memref<64x32xf32, #tpu.memory_space<vmem>>, vector<64x32xf32>
    %12 = arith.truncf %11 : vector<64x32xf32> to vector<64x32xbf16>
    %cst = arith.constant dense<0.000000e+00> : vector<64x128xf32>
    %13 = tpu.matmul %12, %1, %cst {dimension_numbers = #tpu.dot_dimension_numbers<[1], [0], [0], [1], [0, 0, 1, 1], [], []>} : vector<64x32xbf16>, vector<32x128xbf16>, vector<64x128xf32> -> vector<64x128xf32>
    %14 = vector.broadcast %5 : vector<1x128xf32> to vector<64x128xf32>
    %15 = arith.addf %13, %14 : vector<64x128xf32>
    %cst_9 = arith.constant 0.000000e+00 : bf16
    %16 = vector.broadcast %cst_9 : bf16 to vector<8x32xbf16>
    %cst_10 = arith.constant 0.000000e+00 : f32
    %17 = vector.broadcast %cst_10 : f32 to vector<8x32xf32>
    %18 = vector.extract_strided_slice %15 {offsets = [0, 0], sizes = [8, 128], strides = [1, 1]} : vector<64x128xf32> to vector<8x128xf32>
    %cst_11 = arith.constant dense<0.000000e+00> : vector<8x128xf32>
    %19 = tpu.matmul %16, %3, %cst_11 {dimension_numbers = #tpu.dot_dimension_numbers<[1], [0], [0], [1], [0, 0, 1, 1], [], []>} : vector<8x32xbf16>, vector<32x128xbf16>, vector<8x128xf32> -> vector<8x128xf32>
    %20 = arith.addf %18, %19 : vector<8x128xf32>
    %21 = arith.negf %20 : vector<8x128xf32>
    %22 = math.exp %21 : vector<8x128xf32>
    %cst_12 = arith.constant 1.000000e+00 : f32
    %23 = vector.broadcast %cst_12 : f32 to vector<8x128xf32>
    %24 = arith.addf %23, %22 : vector<8x128xf32>
    %25 = arith.divf %23, %24 : vector<8x128xf32>
    %26 = vector.extract_strided_slice %25 {offsets = [0, 0], sizes = [8, 32], strides = [1, 1]} : vector<8x128xf32> to vector<8x32xf32>
    %27 = vector.extract_strided_slice %25 {offsets = [0, 32], sizes = [8, 32], strides = [1, 1]} : vector<8x128xf32> to vector<8x32xf32>
    %28 = vector.extract_strided_slice %25 {offsets = [0, 96], sizes = [8, 32], strides = [1, 1]} : vector<8x128xf32> to vector<8x32xf32>
    %29 = vector.extract_strided_slice %20 {offsets = [0, 64], sizes = [8, 32], strides = [1, 1]} : vector<8x128xf32> to vector<8x32xf32>
    %30 = math.tanh %29 : vector<8x32xf32>
    %31 = arith.mulf %27, %17 : vector<8x32xf32>
    %32 = arith.mulf %26, %30 : vector<8x32xf32>
    %33 = arith.addf %31, %32 : vector<8x32xf32>
    %34 = math.tanh %33 : vector<8x32xf32>
    %35 = arith.mulf %28, %34 : vector<8x32xf32>
    %c0_i32 = arith.constant 0 : i32
    %36 = vector.broadcast %c0_i32 : i32 to vector<8x1xi32>
    %37 = arith.cmpi sgt, %10, %36 : vector<8x1xi32>
    %38 = arith.truncf %35 : vector<8x32xf32> to vector<8x32xbf16>
    %39 = vector.shape_cast %37 : vector<8x1xi1> to vector<8x1xi1>
    %40 = vector.broadcast %39 : vector<8x1xi1> to vector<8x32xi1>
    %41 = arith.select %40, %38, %16 : vector<8x32xi1>, vector<8x32xbf16>
    %42 = vector.shape_cast %37 : vector<8x1xi1> to vector<8x1xi1>
    %43 = vector.broadcast %42 : vector<8x1xi1> to vector<8x32xi1>
    %44 = arith.select %43, %33, %17 : vector<8x32xi1>, vector<8x32xf32>
    %45 = vector.extract_strided_slice %15 {offsets = [8, 0], sizes = [8, 128], strides = [1, 1]} : vector<64x128xf32> to vector<8x128xf32>
    %cst_13 = arith.constant dense<0.000000e+00> : vector<8x128xf32>
    %46 = tpu.matmul %41, %3, %cst_13 {dimension_numbers = #tpu.dot_dimension_numbers<[1], [0], [0], [1], [0, 0, 1, 1], [], []>} : vector<8x32xbf16>, vector<32x128xbf16>, vector<8x128xf32> -> vector<8x128xf32>
    %47 = arith.addf %45, %46 : vector<8x128xf32>
    %48 = arith.negf %47 : vector<8x128xf32>
    %49 = math.exp %48 : vector<8x128xf32>
    %cst_14 = arith.constant 1.000000e+00 : f32
    %50 = vector.broadcast %cst_14 : f32 to vector<8x128xf32>
    %51 = arith.addf %50, %49 : vector<8x128xf32>
    %52 = arith.divf %50, %51 : vector<8x128xf32>
    %53 = vector.extract_strided_slice %52 {offsets = [0, 0], sizes = [8, 32], strides = [1, 1]} : vector<8x128xf32> to vector<8x32xf32>
    %54 = vector.extract_strided_slice %52 {offsets = [0, 32], sizes = [8, 32], strides = [1, 1]} : vector<8x128xf32> to vector<8x32xf32>
    %55 = vector.extract_strided_slice %52 {offsets = [0, 96], sizes = [8, 32], strides = [1, 1]} : vector<8x128xf32> to vector<8x32xf32>
    %56 = vector.extract_strided_slice %47 {offsets = [0, 64], sizes = [8, 32], strides = [1, 1]} : vector<8x128xf32> to vector<8x32xf32>
    %57 = math.tanh %56 : vector<8x32xf32>
    %58 = arith.mulf %54, %44 : vector<8x32xf32>
    %59 = arith.mulf %53, %57 : vector<8x32xf32>
    %60 = arith.addf %58, %59 : vector<8x32xf32>
    %61 = math.tanh %60 : vector<8x32xf32>
    %62 = arith.mulf %55, %61 : vector<8x32xf32>
    %c1_i32 = arith.constant 1 : i32
    %63 = vector.broadcast %c1_i32 : i32 to vector<8x1xi32>
    %64 = arith.cmpi sgt, %10, %63 : vector<8x1xi32>
    %65 = arith.truncf %62 : vector<8x32xf32> to vector<8x32xbf16>
    %66 = vector.shape_cast %64 : vector<8x1xi1> to vector<8x1xi1>
    %67 = vector.broadcast %66 : vector<8x1xi1> to vector<8x32xi1>
    %68 = arith.select %67, %65, %41 : vector<8x32xi1>, vector<8x32xbf16>
    %69 = vector.shape_cast %64 : vector<8x1xi1> to vector<8x1xi1>
    %70 = vector.broadcast %69 : vector<8x1xi1> to vector<8x32xi1>
    %71 = arith.select %70, %60, %44 : vector<8x32xi1>, vector<8x32xf32>
    %72 = vector.extract_strided_slice %15 {offsets = [16, 0], sizes = [8, 128], strides = [1, 1]} : vector<64x128xf32> to vector<8x128xf32>
    %cst_15 = arith.constant dense<0.000000e+00> : vector<8x128xf32>
    %73 = tpu.matmul %68, %3, %cst_15 {dimension_numbers = #tpu.dot_dimension_numbers<[1], [0], [0], [1], [0, 0, 1, 1], [], []>} : vector<8x32xbf16>, vector<32x128xbf16>, vector<8x128xf32> -> vector<8x128xf32>
    %74 = arith.addf %72, %73 : vector<8x128xf32>
    %75 = arith.negf %74 : vector<8x128xf32>
    %76 = math.exp %75 : vector<8x128xf32>
    %cst_16 = arith.constant 1.000000e+00 : f32
    %77 = vector.broadcast %cst_16 : f32 to vector<8x128xf32>
    %78 = arith.addf %77, %76 : vector<8x128xf32>
    %79 = arith.divf %77, %78 : vector<8x128xf32>
    %80 = vector.extract_strided_slice %79 {offsets = [0, 0], sizes = [8, 32], strides = [1, 1]} : vector<8x128xf32> to vector<8x32xf32>
    %81 = vector.extract_strided_slice %79 {offsets = [0, 32], sizes = [8, 32], strides = [1, 1]} : vector<8x128xf32> to vector<8x32xf32>
    %82 = vector.extract_strided_slice %79 {offsets = [0, 96], sizes = [8, 32], strides = [1, 1]} : vector<8x128xf32> to vector<8x32xf32>
    %83 = vector.extract_strided_slice %74 {offsets = [0, 64], sizes = [8, 32], strides = [1, 1]} : vector<8x128xf32> to vector<8x32xf32>
    %84 = math.tanh %83 : vector<8x32xf32>
    %85 = arith.mulf %81, %71 : vector<8x32xf32>
    %86 = arith.mulf %80, %84 : vector<8x32xf32>
    %87 = arith.addf %85, %86 : vector<8x32xf32>
    %88 = math.tanh %87 : vector<8x32xf32>
    %89 = arith.mulf %82, %88 : vector<8x32xf32>
    %c2_i32 = arith.constant 2 : i32
    %90 = vector.broadcast %c2_i32 : i32 to vector<8x1xi32>
    %91 = arith.cmpi sgt, %10, %90 : vector<8x1xi32>
    %92 = arith.truncf %89 : vector<8x32xf32> to vector<8x32xbf16>
    %93 = vector.shape_cast %91 : vector<8x1xi1> to vector<8x1xi1>
    %94 = vector.broadcast %93 : vector<8x1xi1> to vector<8x32xi1>
    %95 = arith.select %94, %92, %68 : vector<8x32xi1>, vector<8x32xbf16>
    %96 = vector.shape_cast %91 : vector<8x1xi1> to vector<8x1xi1>
    %97 = vector.broadcast %96 : vector<8x1xi1> to vector<8x32xi1>
    %98 = arith.select %97, %87, %71 : vector<8x32xi1>, vector<8x32xf32>
    %99 = vector.extract_strided_slice %15 {offsets = [24, 0], sizes = [8, 128], strides = [1, 1]} : vector<64x128xf32> to vector<8x128xf32>
    %cst_17 = arith.constant dense<0.000000e+00> : vector<8x128xf32>
    %100 = tpu.matmul %95, %3, %cst_17 {dimension_numbers = #tpu.dot_dimension_numbers<[1], [0], [0], [1], [0, 0, 1, 1], [], []>} : vector<8x32xbf16>, vector<32x128xbf16>, vector<8x128xf32> -> vector<8x128xf32>
    %101 = arith.addf %99, %100 : vector<8x128xf32>
    %102 = arith.negf %101 : vector<8x128xf32>
    %103 = math.exp %102 : vector<8x128xf32>
    %cst_18 = arith.constant 1.000000e+00 : f32
    %104 = vector.broadcast %cst_18 : f32 to vector<8x128xf32>
    %105 = arith.addf %104, %103 : vector<8x128xf32>
    %106 = arith.divf %104, %105 : vector<8x128xf32>
    %107 = vector.extract_strided_slice %106 {offsets = [0, 0], sizes = [8, 32], strides = [1, 1]} : vector<8x128xf32> to vector<8x32xf32>
    %108 = vector.extract_strided_slice %106 {offsets = [0, 32], sizes = [8, 32], strides = [1, 1]} : vector<8x128xf32> to vector<8x32xf32>
    %109 = vector.extract_strided_slice %106 {offsets = [0, 96], sizes = [8, 32], strides = [1, 1]} : vector<8x128xf32> to vector<8x32xf32>
    %110 = vector.extract_strided_slice %101 {offsets = [0, 64], sizes = [8, 32], strides = [1, 1]} : vector<8x128xf32> to vector<8x32xf32>
    %111 = math.tanh %110 : vector<8x32xf32>
    %112 = arith.mulf %108, %98 : vector<8x32xf32>
    %113 = arith.mulf %107, %111 : vector<8x32xf32>
    %114 = arith.addf %112, %113 : vector<8x32xf32>
    %115 = math.tanh %114 : vector<8x32xf32>
    %116 = arith.mulf %109, %115 : vector<8x32xf32>
    %c3_i32 = arith.constant 3 : i32
    %117 = vector.broadcast %c3_i32 : i32 to vector<8x1xi32>
    %118 = arith.cmpi sgt, %10, %117 : vector<8x1xi32>
    %119 = arith.truncf %116 : vector<8x32xf32> to vector<8x32xbf16>
    %120 = vector.shape_cast %118 : vector<8x1xi1> to vector<8x1xi1>
    %121 = vector.broadcast %120 : vector<8x1xi1> to vector<8x32xi1>
    %122 = arith.select %121, %119, %95 : vector<8x32xi1>, vector<8x32xbf16>
    %123 = vector.shape_cast %118 : vector<8x1xi1> to vector<8x1xi1>
    %124 = vector.broadcast %123 : vector<8x1xi1> to vector<8x32xi1>
    %125 = arith.select %124, %114, %98 : vector<8x32xi1>, vector<8x32xf32>
    %126 = vector.extract_strided_slice %15 {offsets = [32, 0], sizes = [8, 128], strides = [1, 1]} : vector<64x128xf32> to vector<8x128xf32>
    %cst_19 = arith.constant dense<0.000000e+00> : vector<8x128xf32>
    %127 = tpu.matmul %122, %3, %cst_19 {dimension_numbers = #tpu.dot_dimension_numbers<[1], [0], [0], [1], [0, 0, 1, 1], [], []>} : vector<8x32xbf16>, vector<32x128xbf16>, vector<8x128xf32> -> vector<8x128xf32>
    %128 = arith.addf %126, %127 : vector<8x128xf32>
    %129 = arith.negf %128 : vector<8x128xf32>
    %130 = math.exp %129 : vector<8x128xf32>
    %cst_20 = arith.constant 1.000000e+00 : f32
    %131 = vector.broadcast %cst_20 : f32 to vector<8x128xf32>
    %132 = arith.addf %131, %130 : vector<8x128xf32>
    %133 = arith.divf %131, %132 : vector<8x128xf32>
    %134 = vector.extract_strided_slice %133 {offsets = [0, 0], sizes = [8, 32], strides = [1, 1]} : vector<8x128xf32> to vector<8x32xf32>
    %135 = vector.extract_strided_slice %133 {offsets = [0, 32], sizes = [8, 32], strides = [1, 1]} : vector<8x128xf32> to vector<8x32xf32>
    %136 = vector.extract_strided_slice %133 {offsets = [0, 96], sizes = [8, 32], strides = [1, 1]} : vector<8x128xf32> to vector<8x32xf32>
    %137 = vector.extract_strided_slice %128 {offsets = [0, 64], sizes = [8, 32], strides = [1, 1]} : vector<8x128xf32> to vector<8x32xf32>
    %138 = math.tanh %137 : vector<8x32xf32>
    %139 = arith.mulf %135, %125 : vector<8x32xf32>
    %140 = arith.mulf %134, %138 : vector<8x32xf32>
    %141 = arith.addf %139, %140 : vector<8x32xf32>
    %142 = math.tanh %141 : vector<8x32xf32>
    %143 = arith.mulf %136, %142 : vector<8x32xf32>
    %c4_i32 = arith.constant 4 : i32
    %144 = vector.broadcast %c4_i32 : i32 to vector<8x1xi32>
    %145 = arith.cmpi sgt, %10, %144 : vector<8x1xi32>
    %146 = arith.truncf %143 : vector<8x32xf32> to vector<8x32xbf16>
    %147 = vector.shape_cast %145 : vector<8x1xi1> to vector<8x1xi1>
    %148 = vector.broadcast %147 : vector<8x1xi1> to vector<8x32xi1>
    %149 = arith.select %148, %146, %122 : vector<8x32xi1>, vector<8x32xbf16>
    %150 = vector.shape_cast %145 : vector<8x1xi1> to vector<8x1xi1>
    %151 = vector.broadcast %150 : vector<8x1xi1> to vector<8x32xi1>
    %152 = arith.select %151, %141, %125 : vector<8x32xi1>, vector<8x32xf32>
    %153 = vector.extract_strided_slice %15 {offsets = [40, 0], sizes = [8, 128], strides = [1, 1]} : vector<64x128xf32> to vector<8x128xf32>
    %cst_21 = arith.constant dense<0.000000e+00> : vector<8x128xf32>
    %154 = tpu.matmul %149, %3, %cst_21 {dimension_numbers = #tpu.dot_dimension_numbers<[1], [0], [0], [1], [0, 0, 1, 1], [], []>} : vector<8x32xbf16>, vector<32x128xbf16>, vector<8x128xf32> -> vector<8x128xf32>
    %155 = arith.addf %153, %154 : vector<8x128xf32>
    %156 = arith.negf %155 : vector<8x128xf32>
    %157 = math.exp %156 : vector<8x128xf32>
    %cst_22 = arith.constant 1.000000e+00 : f32
    %158 = vector.broadcast %cst_22 : f32 to vector<8x128xf32>
    %159 = arith.addf %158, %157 : vector<8x128xf32>
    %160 = arith.divf %158, %159 : vector<8x128xf32>
    %161 = vector.extract_strided_slice %160 {offsets = [0, 0], sizes = [8, 32], strides = [1, 1]} : vector<8x128xf32> to vector<8x32xf32>
    %162 = vector.extract_strided_slice %160 {offsets = [0, 32], sizes = [8, 32], strides = [1, 1]} : vector<8x128xf32> to vector<8x32xf32>
    %163 = vector.extract_strided_slice %160 {offsets = [0, 96], sizes = [8, 32], strides = [1, 1]} : vector<8x128xf32> to vector<8x32xf32>
    %164 = vector.extract_strided_slice %155 {offsets = [0, 64], sizes = [8, 32], strides = [1, 1]} : vector<8x128xf32> to vector<8x32xf32>
    %165 = math.tanh %164 : vector<8x32xf32>
    %166 = arith.mulf %162, %152 : vector<8x32xf32>
    %167 = arith.mulf %161, %165 : vector<8x32xf32>
    %168 = arith.addf %166, %167 : vector<8x32xf32>
    %169 = math.tanh %168 : vector<8x32xf32>
    %170 = arith.mulf %163, %169 : vector<8x32xf32>
    %c5_i32 = arith.constant 5 : i32
    %171 = vector.broadcast %c5_i32 : i32 to vector<8x1xi32>
    %172 = arith.cmpi sgt, %10, %171 : vector<8x1xi32>
    %173 = arith.truncf %170 : vector<8x32xf32> to vector<8x32xbf16>
    %174 = vector.shape_cast %172 : vector<8x1xi1> to vector<8x1xi1>
    %175 = vector.broadcast %174 : vector<8x1xi1> to vector<8x32xi1>
    %176 = arith.select %175, %173, %149 : vector<8x32xi1>, vector<8x32xbf16>
    %177 = vector.shape_cast %172 : vector<8x1xi1> to vector<8x1xi1>
    %178 = vector.broadcast %177 : vector<8x1xi1> to vector<8x32xi1>
    %179 = arith.select %178, %168, %152 : vector<8x32xi1>, vector<8x32xf32>
    %180 = vector.extract_strided_slice %15 {offsets = [48, 0], sizes = [8, 128], strides = [1, 1]} : vector<64x128xf32> to vector<8x128xf32>
    %cst_23 = arith.constant dense<0.000000e+00> : vector<8x128xf32>
    %181 = tpu.matmul %176, %3, %cst_23 {dimension_numbers = #tpu.dot_dimension_numbers<[1], [0], [0], [1], [0, 0, 1, 1], [], []>} : vector<8x32xbf16>, vector<32x128xbf16>, vector<8x128xf32> -> vector<8x128xf32>
    %182 = arith.addf %180, %181 : vector<8x128xf32>
    %183 = arith.negf %182 : vector<8x128xf32>
    %184 = math.exp %183 : vector<8x128xf32>
    %cst_24 = arith.constant 1.000000e+00 : f32
    %185 = vector.broadcast %cst_24 : f32 to vector<8x128xf32>
    %186 = arith.addf %185, %184 : vector<8x128xf32>
    %187 = arith.divf %185, %186 : vector<8x128xf32>
    %188 = vector.extract_strided_slice %187 {offsets = [0, 0], sizes = [8, 32], strides = [1, 1]} : vector<8x128xf32> to vector<8x32xf32>
    %189 = vector.extract_strided_slice %187 {offsets = [0, 32], sizes = [8, 32], strides = [1, 1]} : vector<8x128xf32> to vector<8x32xf32>
    %190 = vector.extract_strided_slice %187 {offsets = [0, 96], sizes = [8, 32], strides = [1, 1]} : vector<8x128xf32> to vector<8x32xf32>
    %191 = vector.extract_strided_slice %182 {offsets = [0, 64], sizes = [8, 32], strides = [1, 1]} : vector<8x128xf32> to vector<8x32xf32>
    %192 = math.tanh %191 : vector<8x32xf32>
    %193 = arith.mulf %189, %179 : vector<8x32xf32>
    %194 = arith.mulf %188, %192 : vector<8x32xf32>
    %195 = arith.addf %193, %194 : vector<8x32xf32>
    %196 = math.tanh %195 : vector<8x32xf32>
    %197 = arith.mulf %190, %196 : vector<8x32xf32>
    %c6_i32 = arith.constant 6 : i32
    %198 = vector.broadcast %c6_i32 : i32 to vector<8x1xi32>
    %199 = arith.cmpi sgt, %10, %198 : vector<8x1xi32>
    %200 = arith.truncf %197 : vector<8x32xf32> to vector<8x32xbf16>
    %201 = vector.shape_cast %199 : vector<8x1xi1> to vector<8x1xi1>
    %202 = vector.broadcast %201 : vector<8x1xi1> to vector<8x32xi1>
    %203 = arith.select %202, %200, %176 : vector<8x32xi1>, vector<8x32xbf16>
    %204 = vector.shape_cast %199 : vector<8x1xi1> to vector<8x1xi1>
    %205 = vector.broadcast %204 : vector<8x1xi1> to vector<8x32xi1>
    %206 = arith.select %205, %195, %179 : vector<8x32xi1>, vector<8x32xf32>
    %207 = vector.extract_strided_slice %15 {offsets = [56, 0], sizes = [8, 128], strides = [1, 1]} : vector<64x128xf32> to vector<8x128xf32>
    %cst_25 = arith.constant dense<0.000000e+00> : vector<8x128xf32>
    %208 = tpu.matmul %203, %3, %cst_25 {dimension_numbers = #tpu.dot_dimension_numbers<[1], [0], [0], [1], [0, 0, 1, 1], [], []>} : vector<8x32xbf16>, vector<32x128xbf16>, vector<8x128xf32> -> vector<8x128xf32>
    %209 = arith.addf %207, %208 : vector<8x128xf32>
    %210 = arith.negf %209 : vector<8x128xf32>
    %211 = math.exp %210 : vector<8x128xf32>
    %cst_26 = arith.constant 1.000000e+00 : f32
    %212 = vector.broadcast %cst_26 : f32 to vector<8x128xf32>
    %213 = arith.addf %212, %211 : vector<8x128xf32>
    %214 = arith.divf %212, %213 : vector<8x128xf32>
    %215 = vector.extract_strided_slice %214 {offsets = [0, 0], sizes = [8, 32], strides = [1, 1]} : vector<8x128xf32> to vector<8x32xf32>
    %216 = vector.extract_strided_slice %214 {offsets = [0, 32], sizes = [8, 32], strides = [1, 1]} : vector<8x128xf32> to vector<8x32xf32>
    %217 = vector.extract_strided_slice %214 {offsets = [0, 96], sizes = [8, 32], strides = [1, 1]} : vector<8x128xf32> to vector<8x32xf32>
    %218 = vector.extract_strided_slice %209 {offsets = [0, 64], sizes = [8, 32], strides = [1, 1]} : vector<8x128xf32> to vector<8x32xf32>
    %219 = math.tanh %218 : vector<8x32xf32>
    %220 = arith.mulf %216, %206 : vector<8x32xf32>
    %221 = arith.mulf %215, %219 : vector<8x32xf32>
    %222 = arith.addf %220, %221 : vector<8x32xf32>
    %223 = math.tanh %222 : vector<8x32xf32>
    %224 = arith.mulf %217, %223 : vector<8x32xf32>
    %c7_i32 = arith.constant 7 : i32
    %225 = vector.broadcast %c7_i32 : i32 to vector<8x1xi32>
    %226 = arith.cmpi sgt, %10, %225 : vector<8x1xi32>
    %227 = arith.truncf %224 : vector<8x32xf32> to vector<8x32xbf16>
    %228 = vector.shape_cast %226 : vector<8x1xi1> to vector<8x1xi1>
    %229 = vector.broadcast %228 : vector<8x1xi1> to vector<8x32xi1>
    %230 = arith.select %229, %227, %203 : vector<8x32xi1>, vector<8x32xbf16>
    %cst_27 = arith.constant dense<0.000000e+00> : vector<8x128xf32>
    %231 = tpu.matmul %230, %7, %cst_27 {dimension_numbers = #tpu.dot_dimension_numbers<[1], [0], [0], [1], [0, 0, 1, 1], [], []>} : vector<8x32xbf16>, vector<32x128xbf16>, vector<8x128xf32> -> vector<8x128xf32>
    %232 = vector.broadcast %9 : vector<1x128xf32> to vector<8x128xf32>
    %233 = arith.addf %231, %232 : vector<8x128xf32>
    %c0_28 = arith.constant 0 : index
    %c0_29 = arith.constant 0 : index
    %234 = vector.load %arg3[%c0_28, %c0_29] : memref<8x128xf32, #tpu.memory_space<vmem>>, vector<8x128xf32>
    tpu.vector_store %arg3[%c0_28, %c0_29], %233 {strides = array<i32>} : memref<8x128xf32, #tpu.memory_space<vmem>>, vector<8x128xf32>,
    return
  }
}

</mosaic_0001>

<llo_original>
// kernel: tpu_custom_call.1
$region0: #{tpu_custom_call.1}
  #allocation0 [shape = 'u32[]', space=smem, size = 0x4, offset = 0x4, fixed_abs, tag = 'smem constant byte address 0x4 - core index']
  #allocation1 [shape = 'u32[72,128]{1,0:T(1,128)}', space=vmem, size = 0x9000, scoped, tag = 'internal scratch']
  %s0 = inlined_call_operand.vmem [shape: f32[64,32], index: 0, kind: input, shape index: {}]
  %s1 = inlined_call_operand.vmem [shape: s32[8,1], index: 1, kind: input, shape index: {}]
  %s2 = inlined_call_operand.hbm [shape: f32[112,128], index: 2, kind: input, shape index: {}]
  %s3 = inlined_call_operand.hbm [shape: f32[8,128], index: 3, kind: output, shape index: {}]
  %s4 = sld [smem:[#allocation0]]
  $region26: #{tpu_custom_call.1} parent=0
    _
  %s6 = ssub.s32 1, %s4
  %s7 = scalar_select 0, %s6, %s4
  $region1: #{tpu_custom_call.1} parent=0
    #allocation2 [shape = 'u8[57344]{0}', space=vmem, size = 0xe000, scoped, tag = 'input window, operand 2, single buffered']
    #allocation3 [shape = 's32[1]{0}', space=sflag, size = 0x4, scoped, tag = 'scoped memory for tpu_custom_call.1']
    #allocation4 [shape = 's32[1]{0}', space=sflag, size = 0x4, scoped, tag = 'scoped memory for tpu_custom_call.1']
    #allocation5 [shape = 'u8[4096]{0}', space=vmem, size = 0x1000, scoped, tag = 'output window, operand 0, single buffered']
    %8 = vsyncpa [#allocation3], 0
    %9 = vsyncpa [#allocation4], 0
    // Predicated region
    $region2: #{tpu_custom_call.1} parent=1 // pred_check
      _
    $region3: #{tpu_custom_call.1} parent=1 // pred_check_branch
      %11 = sbr.rel (0) target = $region5
    $region4: #{tpu_custom_call.1} parent=1 // pred_region
      _
    $region5: #{tpu_custom_call.1} parent=1 // pred_fallthru
      _
    // Predicated region
    $region6: #{tpu_custom_call.1} parent=1 // pred_check
      _
    $region7: #{tpu_custom_call.1} parent=1 // pred_check_branch
      %13 = sbr.rel (0) target = $region9
    $region8: #{tpu_custom_call.1} parent=1 // pred_region
      _
    $region9: #{tpu_custom_call.1} parent=1 // pred_fallthru
      _
    // Predicated region
    $region10: #{tpu_custom_call.1} parent=1 // pred_check
      _
    $region11: #{tpu_custom_call.1} parent=1 // pred_check_branch
      %15 = sbr.rel (0) target = $region13
    $region12: #{tpu_custom_call.1} parent=1 // pred_region
      %17 = vsyncadd [#allocation3], 0
      %s18 = sshll.u32 %s2, 4
      %s19 = int_to_ptr.hbm [resolvable:$true] %s18
      %s20 = sshll.u32 [#allocation2], 4
      %s21 = int_to_ptr.vmem [resolvable:$true] %s20
      %26 = dma.hbm_to_vmem [thread:$0]  %s19, 1792, %s21, [#allocation3], 128, 128, 8
    $region13: #{tpu_custom_call.1} parent=1 // pred_fallthru
      _
    // Predicated region
    $region14: #{tpu_custom_call.1} parent=1 // pred_check
      _
    $region15: #{tpu_custom_call.1} parent=1 // pred_check_branch
      %28 = sbr.rel (0) target = $region17
    $region16: #{tpu_custom_call.1} parent=1 // pred_region
      %30 = dma.done [#allocation3], 1792
    $region17: #{tpu_custom_call.1} parent=1 // pred_fallthru
      _
    %v32 = vld [vmem:[#allocation2] sm:$0xff]
    %v33 = vld [vmem:[#allocation2 + $0x8] sm:$0xff]
    %v34 = vld [vmem:[#allocation2 + $0x10] sm:$0xff]
    %v35 = vld [vmem:[#allocation2 + $0x18] sm:$0xff]
    %v36 = vpack.c.bf16 %v33, %v32
    %v37 = vpack.c.bf16 %v35, %v34
    %v38 = vld [vmem:[#allocation2 + $0x20] sm:$0xff]
    %v39 = vld [vmem:[#allocation2 + $0x28] sm:$0xff]
    %v40 = vld [vmem:[#allocation2 + $0x30] sm:$0xff]
    %v41 = vld [vmem:[#allocation2 + $0x38] sm:$0xff]
    %v42 = vpack.c.bf16 %v39, %v38
    %v43 = vpack.c.bf16 %v41, %v40
    %v44 = vld [vmem:[#allocation2 + $0x40] sm:$0xff]
    %v45 = vld [vmem:[#allocation2 + $0x48] sm:$0xff]
    %v46 = vld [vmem:[#allocation2 + $0x50] sm:$0xff]
    %v47 = vld [vmem:[#allocation2 + $0x58] sm:$0xff]
    %v48 = vld [vmem:[#allocation2 + $0x60] sm:$0xff]
    %v49 = vpack.c.bf16 %v46, %v45
    %v50 = vpack.c.bf16 %v48, %v47
    %v51 = vld [vmem:[#allocation2 + $0x68] sm:$0xff]
    %v52 = vld [vmem:[%s1] sm:$0xff]
    %v53 = vld [vmem:[%s0] sm:$0xff]
    %v54 = vld [vmem:[%s0 + $0x8] sm:$0xff]
    %v55 = vld [vmem:[%s0 + $0x10] sm:$0xff]
    %v56 = vld [vmem:[%s0 + $0x18] sm:$0xff]
    %v57 = vld [vmem:[%s0 + $0x20] sm:$0xff]
    %v58 = vld [vmem:[%s0 + $0x28] sm:$0xff]
    %v59 = vld [vmem:[%s0 + $0x30] sm:$0xff]
    %v60 = vld [vmem:[%s0 + $0x38] sm:$0xff]
    %v61 = vpack.c.bf16 %v54, %v53
    %v62 = vpack.c.bf16 %v56, %v55
    %v63 = vpack.c.bf16 %v58, %v57
    %v64 = vpack.c.bf16 %v60, %v59
    %v65 = vperm.slane %v44, 0
    %vm66 = vcmask 261120
    %v68 = vsel %vm66, %v61, 0
    %v71 = vsel %vm66, %v62, 0
    %v74 = vsel %vm66, %v63, 0
    %v77 = vsel %vm66, %v64, 0
    %79 = vmatpush.bf16.msra.mxu0 0
    %80 = vmatpush.bf16.msra.mxu0 0
    %81 = vmatpush.bf16.msra.mxu0 0
    %82 = vmatpush.bf16.msra.mxu0 0
    %83 = vmatpush.bf16.msra.mxu0 0
    %84 = vmatpush.bf16.msra.mxu0 0
    %85 = vmatpush.bf16.msra.mxu0 %v37
    %86 = vmatpush.bf16.msra.mxu0 %v36
    %87 = vmatmul.bf16.gmra.mxu0 %v68
    %v88 = vpop.f32.mrf.mxu0
    %v89 = vadd.f32 %v65, %v88
    %v90 = vpop.f32.mrf.mxu0
    %v91 = vadd.f32 %v65, %v90
    %92 = vmatmul.bf16.gmra.mxu0 %v71
    %v93 = vpop.f32.mrf.mxu0
    %v94 = vadd.f32 %v65, %v93
    %v95 = vpop.f32.mrf.mxu0
    %v96 = vadd.f32 %v65, %v95
    %97 = vmatmul.bf16.gmra.mxu0 %v74
    %v98 = vpop.f32.mrf.mxu0
    %v99 = vadd.f32 %v65, %v98
    %v100 = vpop.f32.mrf.mxu0
    %v101 = vadd.f32 %v65, %v100
    %102 = vmatmul.bf16.gmra.mxu0 %v77
    %v103 = vpop.f32.mrf.mxu0
    %v104 = vadd.f32 %v65, %v103
    %v105 = vpop.f32.mrf.mxu0
    %v106 = vadd.f32 %v65, %v105
    %107 = vdwg.mxu0
    %v109 = vsel %vm66, 0, 0
    %111 = vmatpush.bf16.msra.mxu0 0
    %112 = vmatpush.bf16.msra.mxu0 0
    %113 = vmatpush.bf16.msra.mxu0 0
    %114 = vmatpush.bf16.msra.mxu0 0
    %115 = vmatpush.bf16.msra.mxu0 0
    %116 = vmatpush.bf16.msra.mxu0 0
    %117 = vmatpush.bf16.msra.mxu0 %v43
    %118 = vmatpush.bf16.msra.mxu0 %v42
    %119 = vmatmul.bf16.gmra.mxu0 %v109
    %v120 = vpop.f32.mrf.mxu0
    %v121 = vadd.f32 0.0, %v120
    %v122 = vpop.f32.mrf.mxu0
    %123 = vdwg.mxu0
    %v124 = vadd.f32 %v89, %v121
    %v125 = vxor.u32 %v124, 2147483648
    %v126 = vmul.f32 %v125, 1.442695
    %v127 = vpow.pop %v126
    %v128 = vadd.f32 %v127, 1.0
    %v129 = vrcp.pop %v128
    %v130 = vmul.f32 %v128, %v129
    %v131 = vsub.f32 1.0, %v130
    %v132 = vmul.f32 %v129, %v131
    %v133 = vadd.f32 %v129, %v132
    %vm134 = vweird.f32 %v128
    %vm135 = vweird.f32 %v129
    %vm136 = vmor %vm134, %vm135
    %v137 = vsel %vm136, %v129, %v133
    %v138 = vand.u32 2147483647, %v128
    %vm139 = vcmp.eq.f32.partialorder %v138, 8.507059e+37
    %v140 = vand.u32 %v128, 2147483648
    %v141 = vor.u32 1.1754944e-38, %v140
    %v142 = vsel %vm139, %v141, %v137
    %v143 = vmul.f32 1.0, %v142
    %v144 = vtanh.pop %v124
    %v145 = vmul.f32 %v143, 0.0
    %147 = vrot.lane.b32.xlu0 %v144, 64
    %v148 = vpop.permute.xlu0 %147
    %v150 = vmul.f32 %v143, %v148
    %152 = vrot.lane.b32.xlu0 %v150, 32
    %v153 = vpop.permute.xlu0 %152
    %v155 = vadd.f32 %v145, %v153
    %v156 = vtanh.pop %v155
    %158 = vrot.lane.b32.xlu0 %v156, 64
    %v159 = vpop.permute.xlu0 %158
    %v161 = vmul.f32 %v143, %v159
    %vm162 = vcmp.gt.s32.totalorder %v52, 0
    %v163 = vpack.c.bf16 %v161, %v161
    %v164 = vsel %vm162, 1, 0
    %165 = vset.pattern.permute.xlu0 0
    %166 = vperm.xlu0 %165, %v164
    %v167 = vpop.permute.xlu0 %166
    %vm168 = vcmp.eq.s32.totalorder %v167, 1
    %vm169 = vmpackc.low %vm168, %vm168
    %v170 = vsel %vm169, %v163, 0
    %v171 = vsel %vm168, %v155, 0.0
    %v173 = vunpack.c.l.b16 %v170
    %v174 = vpack.c.b16 %v173, %v173
    %175 = vrot.lane.b32.xlu0 %v174, 32
    %v176 = vpop.permute.xlu0 %175
    %v178 = vsel %vm66, %v176, 0
    %180 = vmatpush.bf16.msra.mxu0 0
    %181 = vmatpush.bf16.msra.mxu0 0
    %182 = vmatpush.bf16.msra.mxu0 0
    %183 = vmatpush.bf16.msra.mxu0 0
    %184 = vmatpush.bf16.msra.mxu0 0
    %185 = vmatpush.bf16.msra.mxu0 0
    %186 = vmatpush.bf16.msra.mxu0 %v43
    %187 = vmatpush.bf16.msra.mxu0 %v42
    %188 = vmatmul.bf16.gmra.mxu0 %v178
    %v189 = vpop.f32.mrf.mxu0
    %v190 = vadd.f32 0.0, %v189
    %v191 = vpop.f32.mrf.mxu0
    %192 = vdwg.mxu0
    %v193 = vadd.f32 %v91, %v190
    %v194 = vxor.u32 %v193, 2147483648
    %v195 = vmul.f32 %v194, 1.442695
    %v196 = vpow.pop %v195
    %v197 = vadd.f32 %v196, 1.0
    %v198 = vrcp.pop %v197
    %v199 = vmul.f32 %v197, %v198
    %v200 = vsub.f32 1.0, %v199
    %v201 = vmul.f32 %v198, %v200
    %v202 = vadd.f32 %v198, %v201
    %vm203 = vweird.f32 %v197
    %vm204 = vweird.f32 %v198
    %vm205 = vmor %vm203, %vm204
    %v206 = vsel %vm205, %v198, %v202
    %v207 = vand.u32 2147483647, %v197
    %vm208 = vcmp.eq.f32.partialorder %v207, 8.507059e+37
    %v209 = vand.u32 %v197, 2147483648
    %v210 = vor.u32 1.1754944e-38, %v209
    %v211 = vsel %vm208, %v210, %v206
    %v212 = vmul.f32 1.0, %v211
    %v213 = vtanh.pop %v193
    %v214 = vmul.f32 %v212, %v171
    %216 = vrot.lane.b32.xlu0 %v213, 64
    %v217 = vpop.permute.xlu0 %216
    %v219 = vmul.f32 %v212, %v217
    %221 = vrot.lane.b32.xlu0 %v219, 32
    %v222 = vpop.permute.xlu0 %221
    %v224 = vadd.f32 %v214, %v222
    %v225 = vtanh.pop %v224
    %227 = vrot.lane.b32.xlu0 %v225, 64
    %v228 = vpop.permute.xlu0 %227
    %v230 = vmul.f32 %v212, %v228
    %vm231 = vcmp.gt.s32.totalorder %v52, 1
    %v232 = vpack.c.bf16 %v230, %v230
    %v233 = vsel %vm231, 1, 0
    %234 = vset.pattern.permute.xlu0 0
    %235 = vperm.xlu0 %234, %v233
    %v236 = vpop.permute.xlu0 %235
    %vm237 = vcmp.eq.s32.totalorder %v236, 1
    %vm238 = vmpackc.low %vm237, %vm237
    %v239 = vsel %vm238, %v232, %v170
    %v240 = vsel %vm237, %v224, %v171
    %v242 = vunpack.c.l.b16 %v239
    %v243 = vpack.c.b16 %v242, %v242
    %244 = vrot.lane.b32.xlu0 %v243, 32
    %v245 = vpop.permute.xlu0 %244
    %v247 = vsel %vm66, %v245, 0
    %249 = vmatpush.bf16.msra.mxu0 0
    %250 = vmatpush.bf16.msra.mxu0 0
    %251 = vmatpush.bf16.msra.mxu0 0
    %252 = vmatpush.bf16.msra.mxu0 0
    %253 = vmatpush.bf16.msra.mxu0 0
    %254 = vmatpush.bf16.msra.mxu0 0
    %255 = vmatpush.bf16.msra.mxu0 %v43
    %256 = vmatpush.bf16.msra.mxu0 %v42
    %257 = vmatmul.bf16.gmra.mxu0 %v247
    %v258 = vpop.f32.mrf.mxu0
    %v259 = vadd.f32 0.0, %v258
    %v260 = vpop.f32.mrf.mxu0
    %261 = vdwg.mxu0
    %v262 = vadd.f32 %v94, %v259
    %v263 = vxor.u32 %v262, 2147483648
    %v264 = vmul.f32 %v263, 1.442695
    %v265 = vpow.pop %v264
    %v266 = vadd.f32 %v265, 1.0
    %v267 = vrcp.pop %v266
    %v268 = vmul.f32 %v266, %v267
    %v269 = vsub.f32 1.0, %v268
    %v270 = vmul.f32 %v267, %v269
    %v271 = vadd.f32 %v267, %v270
    %vm272 = vweird.f32 %v266
    %vm273 = vweird.f32 %v267
    %vm274 = vmor %vm272, %vm273
    %v275 = vsel %vm274, %v267, %v271
    %v276 = vand.u32 2147483647, %v266
    %vm277 = vcmp.eq.f32.partialorder %v276, 8.507059e+37
    %v278 = vand.u32 %v266, 2147483648
    %v279 = vor.u32 1.1754944e-38, %v278
    %v280 = vsel %vm277, %v279, %v275
    %v281 = vmul.f32 1.0, %v280
    %v282 = vtanh.pop %v262
    %v283 = vmul.f32 %v281, %v240
    %285 = vrot.lane.b32.xlu0 %v282, 64
    %v286 = vpop.permute.xlu0 %285
    %v288 = vmul.f32 %v281, %v286
    %290 = vrot.lane.b32.xlu0 %v288, 32
    %v291 = vpop.permute.xlu0 %290
    %v293 = vadd.f32 %v283, %v291
    %v294 = vtanh.pop %v293
    %296 = vrot.lane.b32.xlu0 %v294, 64
    %v297 = vpop.permute.xlu0 %296
    %v299 = vmul.f32 %v281, %v297
    %vm300 = vcmp.gt.s32.totalorder %v52, 2
    %v301 = vpack.c.bf16 %v299, %v299
    %v302 = vsel %vm300, 1, 0
    %303 = vset.pattern.permute.xlu0 0
    %304 = vperm.xlu0 %303, %v302
    %v305 = vpop.permute.xlu0 %304
    %vm306 = vcmp.eq.s32.totalorder %v305, 1
    %vm307 = vmpackc.low %vm306, %vm306
    %v308 = vsel %vm307, %v301, %v239
    %v309 = vsel %vm306, %v293, %v240
    %v311 = vunpack.c.l.b16 %v308
    %v312 = vpack.c.b16 %v311, %v311
    %313 = vrot.lane.b32.xlu0 %v312, 32
    %v314 = vpop.permute.xlu0 %313
    %v316 = vsel %vm66, %v314, 0
    %318 = vmatpush.bf16.msra.mxu0 0
    %319 = vmatpush.bf16.msra.mxu0 0
    %320 = vmatpush.bf16.msra.mxu0 0
    %321 = vmatpush.bf16.msra.mxu0 0
    %322 = vmatpush.bf16.msra.mxu0 0
    %323 = vmatpush.bf16.msra.mxu0 0
    %324 = vmatpush.bf16.msra.mxu0 %v43
    %325 = vmatpush.bf16.msra.mxu0 %v42
    %326 = vmatmul.bf16.gmra.mxu0 %v316
    %v327 = vpop.f32.mrf.mxu0
    %v328 = vadd.f32 0.0, %v327
    %v329 = vpop.f32.mrf.mxu0
    %330 = vdwg.mxu0
    %v331 = vadd.f32 %v96, %v328
    %v332 = vxor.u32 %v331, 2147483648
    %v333 = vmul.f32 %v332, 1.442695
    %v334 = vpow.pop %v333
    %v335 = vadd.f32 %v334, 1.0
    %v336 = vrcp.pop %v335
    %v337 = vmul.f32 %v335, %v336
    %v338 = vsub.f32 1.0, %v337
    %v339 = vmul.f32 %v336, %v338
    %v340 = vadd.f32 %v336, %v339
    %vm341 = vweird.f32 %v335
    %vm342 = vweird.f32 %v336
    %vm343 = vmor %vm341, %vm342
    %v344 = vsel %vm343, %v336, %v340
    %v345 = vand.u32 2147483647, %v335
    %vm346 = vcmp.eq.f32.partialorder %v345, 8.507059e+37
    %v347 = vand.u32 %v335, 2147483648
    %v348 = vor.u32 1.1754944e-38, %v347
    %v349 = vsel %vm346, %v348, %v344
    %v350 = vmul.f32 1.0, %v349
    %v351 = vtanh.pop %v331
    %v352 = vmul.f32 %v350, %v309
    %354 = vrot.lane.b32.xlu0 %v351, 64
    %v355 = vpop.permute.xlu0 %354
    %v357 = vmul.f32 %v350, %v355
    %359 = vrot.lane.b32.xlu0 %v357, 32
    %v360 = vpop.permute.xlu0 %359
    %v362 = vadd.f32 %v352, %v360
    %v363 = vtanh.pop %v362
    %365 = vrot.lane.b32.xlu0 %v363, 64
    %v366 = vpop.permute.xlu0 %365
    %v368 = vmul.f32 %v350, %v366
    %vm369 = vcmp.gt.s32.totalorder %v52, 3
    %v370 = vpack.c.bf16 %v368, %v368
    %v371 = vsel %vm369, 1, 0
    %372 = vset.pattern.permute.xlu0 0
    %373 = vperm.xlu0 %372, %v371
    %v374 = vpop.permute.xlu0 %373
    %vm375 = vcmp.eq.s32.totalorder %v374, 1
    %vm376 = vmpackc.low %vm375, %vm375
    %v377 = vsel %vm376, %v370, %v308
    %v378 = vsel %vm375, %v362, %v309
    %v380 = vunpack.c.l.b16 %v377
    %v381 = vpack.c.b16 %v380, %v380
    %382 = vrot.lane.b32.xlu0 %v381, 32
    %v383 = vpop.permute.xlu0 %382
    %v385 = vsel %vm66, %v383, 0
    %387 = vmatpush.bf16.msra.mxu0 0
    %388 = vmatpush.bf16.msra.mxu0 0
    %389 = vmatpush.bf16.msra.mxu0 0
    %390 = vmatpush.bf16.msra.mxu0 0
    %391 = vmatpush.bf16.msra.mxu0 0
    %392 = vmatpush.bf16.msra.mxu0 0
    %393 = vmatpush.bf16.msra.mxu0 %v43
    %394 = vmatpush.bf16.msra.mxu0 %v42
    %395 = vmatmul.bf16.gmra.mxu0 %v385
    %v396 = vpop.f32.mrf.mxu0
    %v397 = vadd.f32 0.0, %v396
    %v398 = vpop.f32.mrf.mxu0
    %399 = vdwg.mxu0
    %v400 = vadd.f32 %v99, %v397
    %v401 = vxor.u32 %v400, 2147483648
    %v402 = vmul.f32 %v401, 1.442695
    %v403 = vpow.pop %v402
    %v404 = vadd.f32 %v403, 1.0
    %v405 = vrcp.pop %v404
    %v406 = vmul.f32 %v404, %v405
    %v407 = vsub.f32 1.0, %v406
    %v408 = vmul.f32 %v405, %v407
    %v409 = vadd.f32 %v405, %v408
    %vm410 = vweird.f32 %v404
    %vm411 = vweird.f32 %v405
    %vm412 = vmor %vm410, %vm411
    %v413 = vsel %vm412, %v405, %v409
    %v414 = vand.u32 2147483647, %v404
    %vm415 = vcmp.eq.f32.partialorder %v414, 8.507059e+37
    %v416 = vand.u32 %v404, 2147483648
    %v417 = vor.u32 1.1754944e-38, %v416
    %v418 = vsel %vm415, %v417, %v413
    %v419 = vmul.f32 1.0, %v418
    %v420 = vtanh.pop %v400
    %v421 = vmul.f32 %v419, %v378
    %423 = vrot.lane.b32.xlu0 %v420, 64
    %v424 = vpop.permute.xlu0 %423
    %v426 = vmul.f32 %v419, %v424
    %428 = vrot.lane.b32.xlu0 %v426, 32
    %v429 = vpop.permute.xlu0 %428
    %v431 = vadd.f32 %v421, %v429
    %v432 = vtanh.pop %v431
    %434 = vrot.lane.b32.xlu0 %v432, 64
    %v435 = vpop.permute.xlu0 %434
    %v437 = vmul.f32 %v419, %v435
    %vm438 = vcmp.gt.s32.totalorder %v52, 4
    %v439 = vpack.c.bf16 %v437, %v437
    %v440 = vsel %vm438, 1, 0
    %441 = vset.pattern.permute.xlu0 0
    %442 = vperm.xlu0 %441, %v440
    %v443 = vpop.permute.xlu0 %442
    %vm444 = vcmp.eq.s32.totalorder %v443, 1
    %vm445 = vmpackc.low %vm444, %vm444
    %v446 = vsel %vm445, %v439, %v377
    %v447 = vsel %vm444, %v431, %v378
    %v449 = vunpack.c.l.b16 %v446
    %v450 = vpack.c.b16 %v449, %v449
    %451 = vrot.lane.b32.xlu0 %v450, 32
    %v452 = vpop.permute.xlu0 %451
    %v454 = vsel %vm66, %v452, 0
    %456 = vmatpush.bf16.msra.mxu0 0
    %457 = vmatpush.bf16.msra.mxu0 0
    %458 = vmatpush.bf16.msra.mxu0 0
    %459 = vmatpush.bf16.msra.mxu0 0
    %460 = vmatpush.bf16.msra.mxu0 0
    %461 = vmatpush.bf16.msra.mxu0 0
    %462 = vmatpush.bf16.msra.mxu0 %v43
    %463 = vmatpush.bf16.msra.mxu0 %v42
    %464 = vmatmul.bf16.gmra.mxu0 %v454
    %v465 = vpop.f32.mrf.mxu0
    %v466 = vadd.f32 0.0, %v465
    %v467 = vpop.f32.mrf.mxu0
    %468 = vdwg.mxu0
    %v469 = vadd.f32 %v101, %v466
    %v470 = vxor.u32 %v469, 2147483648
    %v471 = vmul.f32 %v470, 1.442695
    %v472 = vpow.pop %v471
    %v473 = vadd.f32 %v472, 1.0
    %v474 = vrcp.pop %v473
    %v475 = vmul.f32 %v473, %v474
    %v476 = vsub.f32 1.0, %v475
    %v477 = vmul.f32 %v474, %v476
    %v478 = vadd.f32 %v474, %v477
    %vm479 = vweird.f32 %v473
    %vm480 = vweird.f32 %v474
    %vm481 = vmor %vm479, %vm480
    %v482 = vsel %vm481, %v474, %v478
    %v483 = vand.u32 2147483647, %v473
    %vm484 = vcmp.eq.f32.partialorder %v483, 8.507059e+37
    %v485 = vand.u32 %v473, 2147483648
    %v486 = vor.u32 1.1754944e-38, %v485
    %v487 = vsel %vm484, %v486, %v482
    %v488 = vmul.f32 1.0, %v487
    %v489 = vtanh.pop %v469
    %v490 = vmul.f32 %v488, %v447
    %492 = vrot.lane.b32.xlu0 %v489, 64
    %v493 = vpop.permute.xlu0 %492
    %v495 = vmul.f32 %v488, %v493
    %497 = vrot.lane.b32.xlu0 %v495, 32
    %v498 = vpop.permute.xlu0 %497
    %v500 = vadd.f32 %v490, %v498
    %v501 = vtanh.pop %v500
    %503 = vrot.lane.b32.xlu0 %v501, 64
    %v504 = vpop.permute.xlu0 %503
    %v506 = vmul.f32 %v488, %v504
    %vm507 = vcmp.gt.s32.totalorder %v52, 5
    %v508 = vpack.c.bf16 %v506, %v506
    %v509 = vsel %vm507, 1, 0
    %510 = vset.pattern.permute.xlu0 0
    %511 = vperm.xlu0 %510, %v509
    %v512 = vpop.permute.xlu0 %511
    %vm513 = vcmp.eq.s32.totalorder %v512, 1
    %vm514 = vmpackc.low %vm513, %vm513
    %v515 = vsel %vm514, %v508, %v446
    %v516 = vsel %vm513, %v500, %v447
    %v518 = vunpack.c.l.b16 %v515
    %v519 = vpack.c.b16 %v518, %v518
    %520 = vrot.lane.b32.xlu0 %v519, 32
    %v521 = vpop.permute.xlu0 %520
    %v523 = vsel %vm66, %v521, 0
    %525 = vmatpush.bf16.msra.mxu0 0
    %526 = vmatpush.bf16.msra.mxu0 0
    %527 = vmatpush.bf16.msra.mxu0 0
    %528 = vmatpush.bf16.msra.mxu0 0
    %529 = vmatpush.bf16.msra.mxu0 0
    %530 = vmatpush.bf16.msra.mxu0 0
    %531 = vmatpush.bf16.msra.mxu0 %v43
    %532 = vmatpush.bf16.msra.mxu0 %v42
    %533 = vmatmul.bf16.gmra.mxu0 %v523
    %v534 = vpop.f32.mrf.mxu0
    %v535 = vadd.f32 0.0, %v534
    %v536 = vpop.f32.mrf.mxu0
    %537 = vdwg.mxu0
    %v538 = vadd.f32 %v104, %v535
    %v539 = vxor.u32 %v538, 2147483648
    %v540 = vmul.f32 %v539, 1.442695
    %v541 = vpow.pop %v540
    %v542 = vadd.f32 %v541, 1.0
    %v543 = vrcp.pop %v542
    %v544 = vmul.f32 %v542, %v543
    %v545 = vsub.f32 1.0, %v544
    %v546 = vmul.f32 %v543, %v545
    %v547 = vadd.f32 %v543, %v546
    %vm548 = vweird.f32 %v542
    %vm549 = vweird.f32 %v543
    %vm550 = vmor %vm548, %vm549
    %v551 = vsel %vm550, %v543, %v547
    %v552 = vand.u32 2147483647, %v542
    %vm553 = vcmp.eq.f32.partialorder %v552, 8.507059e+37
    %v554 = vand.u32 %v542, 2147483648
    %v555 = vor.u32 1.1754944e-38, %v554
    %v556 = vsel %vm553, %v555, %v551
    %v557 = vmul.f32 1.0, %v556
    %v558 = vtanh.pop %v538
    %v559 = vmul.f32 %v557, %v516
    %561 = vrot.lane.b32.xlu0 %v558, 64
    %v562 = vpop.permute.xlu0 %561
    %v564 = vmul.f32 %v557, %v562
    %566 = vrot.lane.b32.xlu0 %v564, 32
    %v567 = vpop.permute.xlu0 %566
    %v569 = vadd.f32 %v559, %v567
    %v570 = vtanh.pop %v569
    %572 = vrot.lane.b32.xlu0 %v570, 64
    %v573 = vpop.permute.xlu0 %572
    %v575 = vmul.f32 %v557, %v573
    %vm576 = vcmp.gt.s32.totalorder %v52, 6
    %v577 = vpack.c.bf16 %v575, %v575
    %v578 = vsel %vm576, 1, 0
    %579 = vset.pattern.permute.xlu0 0
    %580 = vperm.xlu0 %579, %v578
    %v581 = vpop.permute.xlu0 %580
    %vm582 = vcmp.eq.s32.totalorder %v581, 1
    %vm583 = vmpackc.low %vm582, %vm582
    %v584 = vsel %vm583, %v577, %v515
    %v585 = vsel %vm582, %v569, %v516
    %v587 = vunpack.c.l.b16 %v584
    %v588 = vpack.c.b16 %v587, %v587
    %589 = vrot.lane.b32.xlu0 %v588, 32
    %v590 = vpop.permute.xlu0 %589
    %v592 = vsel %vm66, %v590, 0
    %594 = vmatpush.bf16.msra.mxu0 0
    %595 = vmatpush.bf16.msra.mxu0 0
    %596 = vmatpush.bf16.msra.mxu0 0
    %597 = vmatpush.bf16.msra.mxu0 0
    %598 = vmatpush.bf16.msra.mxu0 0
    %599 = vmatpush.bf16.msra.mxu0 0
    %600 = vmatpush.bf16.msra.mxu0 %v43
    %601 = vmatpush.bf16.msra.mxu0 %v42
    %602 = vmatmul.bf16.gmra.mxu0 %v592
    %v603 = vpop.f32.mrf.mxu0
    %v604 = vadd.f32 0.0, %v603
    %v605 = vpop.f32.mrf.mxu0
    %606 = vdwg.mxu0
    %v607 = vadd.f32 %v106, %v604
    %v608 = vxor.u32 %v607, 2147483648
    %v609 = vmul.f32 %v608, 1.442695
    %v610 = vpow.pop %v609
    %v611 = vadd.f32 %v610, 1.0
    %v612 = vrcp.pop %v611
    %v613 = vmul.f32 %v611, %v612
    %v614 = vsub.f32 1.0, %v613
    %v615 = vmul.f32 %v612, %v614
    %v616 = vadd.f32 %v612, %v615
    %vm617 = vweird.f32 %v611
    %vm618 = vweird.f32 %v612
    %vm619 = vmor %vm617, %vm618
    %v620 = vsel %vm619, %v612, %v616
    %v621 = vand.u32 2147483647, %v611
    %vm622 = vcmp.eq.f32.partialorder %v621, 8.507059e+37
    %v623 = vand.u32 %v611, 2147483648
    %v624 = vor.u32 1.1754944e-38, %v623
    %v625 = vsel %vm622, %v624, %v620
    %v626 = vmul.f32 1.0, %v625
    %v627 = vtanh.pop %v607
    %v628 = vmul.f32 %v626, %v585
    %630 = vrot.lane.b32.xlu0 %v627, 64
    %v631 = vpop.permute.xlu0 %630
    %v633 = vmul.f32 %v626, %v631
    %635 = vrot.lane.b32.xlu0 %v633, 32
    %v636 = vpop.permute.xlu0 %635
    %v638 = vadd.f32 %v628, %v636
    %v639 = vtanh.pop %v638
    %641 = vrot.lane.b32.xlu0 %v639, 64
    %v642 = vpop.permute.xlu0 %641
    %v644 = vmul.f32 %v626, %v642
    %vm645 = vcmp.gt.s32.totalorder %v52, 7
    %v646 = vpack.c.bf16 %v644, %v644
    %v647 = vsel %vm645, 1, 0
    %648 = vset.pattern.permute.xlu0 0
    %649 = vperm.xlu0 %648, %v647
    %v650 = vpop.permute.xlu0 %649
    %vm651 = vcmp.eq.s32.totalorder %v650, 1
    %vm652 = vmpackc.low %vm651, %vm651
    %v653 = vsel %vm652, %v646, %v584
    %v654 = vperm.slane %v51, 0
    %v656 = vunpack.c.l.b16 %v653
    %v657 = vpack.c.b16 %v656, %v656
    %658 = vrot.lane.b32.xlu0 %v657, 32
    %v659 = vpop.permute.xlu0 %658
    %v661 = vsel %vm66, %v659, 0
    %663 = vmatpush.bf16.msra.mxu0 0
    %664 = vmatpush.bf16.msra.mxu0 0
    %665 = vmatpush.bf16.msra.mxu0 0
    %666 = vmatpush.bf16.msra.mxu0 0
    %667 = vmatpush.bf16.msra.mxu0 0
    %668 = vmatpush.bf16.msra.mxu0 0
    %669 = vmatpush.bf16.msra.mxu0 %v50
    %670 = vmatpush.bf16.msra.mxu0 %v49
    %671 = vmatmul.bf16.gmra.mxu0 %v661
    %v672 = vpop.f32.mrf.mxu0
    %v673 = vadd.f32 %v654, %v672
    %v674 = vpop.f32.mrf.mxu0
    %675 = vdwg.mxu0
    %676 = vst [vmem:[#allocation5] sm:$0xff] %v673
    // Predicated region
    $region18: #{tpu_custom_call.1} parent=1 // pred_check
      _
    $region19: #{tpu_custom_call.1} parent=1 // pred_check_branch
      %678 = sbr.rel (0) target = $region21
    $region20: #{tpu_custom_call.1} parent=1 // pred_region
      %680 = vsyncadd [#allocation4], 0
      %s682 = sshll.u32 [#allocation5], 4
      %s683 = int_to_ptr.vmem [resolvable:$true] %s682
      %s684 = sshll.u32 %s3, 4
      %s685 = int_to_ptr.hbm [resolvable:$true] %s684
      %687 = dma.vmem_to_hbm [thread:$0]  %s683, 128, %s685, [#allocation4]
    $region21: #{tpu_custom_call.1} parent=1 // pred_fallthru
      _
    // Predicated region
    $region22: #{tpu_custom_call.1} parent=1 // pred_check
      _
    $region23: #{tpu_custom_call.1} parent=1 // pred_check_branch
      %689 = sbr.rel (0) target = $region25
    $region24: #{tpu_custom_call.1} parent=1 // pred_region
      %691 = dma.done [#allocation4], 128
    $region25: #{tpu_custom_call.1} parent=1 // pred_fallthru
      _
    %692 = vsyncpa [#allocation3], 1
    %693 = vsyncpa [#allocation4], 1

</llo_original>
